<compile_context>
chip_gen: v5e
topology: v5e:2x2
jax: 0.10.0
libtpu: 0.0.40
codegen_flags: <defaults>
</compile_context>

<pallas_src>
import jax
import jax.numpy as jnp
from jax.experimental import pallas as pl
from jax.experimental.pallas import tpu as pltpu

_MAX_DMAS = 8   # max concurrent DMA descriptors (also the semaphore count)
_SUBLANE = 8    # keep chunk starts sublane-aligned w.r.t. the HBM tiled layout


def _chunk_rows(m):
    """Static (start, size) row chunks; starts are multiples of 8, sizes > 0."""
    if m == 0:
        return []
    units = max(1, m // _SUBLANE)          # number of full 8-row units
    nc = min(_MAX_DMAS, units)
    chunks = []
    for i in range(nc):
        u0 = (i * units) // nc
        u1 = ((i + 1) * units) // nc
        start = u0 * _SUBLANE
        end = m if i == nc - 1 else u1 * _SUBLANE
        chunks.append((start, end - start))
    return chunks


def _make_view_copy_kernel(chunks):
    def kernel(x_hbm, o_hbm, sems):
        copies = [
            pltpu.make_async_copy(
                x_hbm.at[pl.ds(start, size)],
                o_hbm.at[pl.ds(start, size)],
                sems.at[i],
            )
            for i, (start, size) in enumerate(chunks)
        ]
        # Issue every chunk up front: the DMAs run concurrently on the DMA
        # engines (no VMEM staging, no compute to hide them under), then wait.
        for c in copies:
            c.start()
        for c in copies:
            c.wait()
    return kernel


def pallas_view(x, n_feat):
    total = x.size
    assert n_feat > 0 and total % n_feat == 0, (
        "total element count must be divisible by n_feat")
    m = total // n_feat

    if total == 0:
        # Nothing to copy; the metadata reshape is the whole op.
        return jnp.reshape(x, (m, n_feat))

    # The actual "view": a free row-major metadata reshape (contiguous input).
    # The Pallas kernel below materializes it as a pure HBM->HBM memcpy.
    x2d = x.reshape(m, n_feat)

    chunks = _chunk_rows(m)
    itemsize = jnp.dtype(x.dtype).itemsize

    return pl.pallas_call(
        _make_view_copy_kernel(chunks),
        out_shape=jax.ShapeDtypeStruct((m, n_feat), x.dtype),
        in_specs=[pl.BlockSpec(memory_space=pl.ANY)],   # raw HBM ref, no auto-DMA
        out_specs=pl.BlockSpec(memory_space=pl.ANY),    # raw HBM ref, no auto-DMA
        scratch_shapes=[pltpu.SemaphoreType.DMA((len(chunks),))],
        cost_estimate=pl.CostEstimate(
            flops=0,
            transcendentals=0,
            bytes_accessed=2 * total * itemsize,        # exact: read N + write N
        ),
    )(x2d)


if __name__ == "__main__":
    key = jax.random.PRNGKey(0)

    # Small NCHW input: batch=2, channels=4, spatial=16x16.
    x = jax.random.normal(key, (2, 4, 16, 16), dtype=jnp.float32)
    n_feat = 16 * 16  # View(n_feat=256) -> output shape (2*4, 256)

    out = jax.block_until_ready(pallas_view(x, n_feat))
    ref = x.reshape(-1, n_feat)
    assert out.shape == (8, 256), out.shape
    assert out.dtype == x.dtype
    assert bool(jnp.all(out == ref))

    # Awkward shape: element count not a multiple of 128 and a ragged last
    # dim (28) -- previously forced a pad+slice path; now copied directly.
    x2 = jax.random.normal(jax.random.PRNGKey(1), (3, 5, 7, 4), dtype=jnp.float32)
    out2 = jax.block_until_ready(pallas_view(x2, 28))
    assert out2.shape == (15, 28)
    assert bool(jnp.all(out2 == x2.reshape(-1, 28)))

    # Larger case exercising the multi-chunk concurrent-DMA path (256 rows ->
    # 8 sublane-aligned chunks), plus a narrow dtype to confirm the HBM DMA
    # path is dtype/layout agnostic.
    x3 = jax.random.normal(jax.random.PRNGKey(2), (4, 64, 32, 32), dtype=jnp.float32)
    out3 = jax.block_until_ready(pallas_view(x3, 32 * 32))
    assert out3.shape == (256, 1024)
    assert bool(jnp.all(out3 == x3.reshape(-1, 1024)))

    x4 = jax.random.normal(jax.random.PRNGKey(3), (2, 4, 16, 16), dtype=jnp.bfloat16)
    out4 = jax.block_until_ready(pallas_view(x4, 64))
    assert out4.shape == (32, 64)
    assert bool(jnp.all(out4 == x4.reshape(-1, 64)))

    print("KERNEL_OK")
</pallas_src>

<mosaic_0001>
module attributes {stable_mosaic.version = 11 : i64} {
  func.func @kernel(%arg0: memref<8x256xf32, #tpu.memory_space<any>>, %arg1: memref<8x256xf32, #tpu.memory_space<any>>, %arg2: memref<1x!tpu.dma_semaphore, #tpu.memory_space<semaphore_mem>>) attributes {dimension_semantics = [], scalar_prefetch = 0 : i64, scratch_operands = 1 : i64, tpu.core_type = #tpu.core_type<tc>} {
    %c0_i32 = arith.constant 0 : i32
    %c0_i32_0 = arith.constant 0 : i32
    %c0_i32_1 = arith.constant 0 : i32
    %0 = tpu.memref_slice %arg0[%c0_i32_0, %c0_i32_1] : memref<8x256xf32, #tpu.memory_space<any>> -> memref<8x256xf32, #tpu.memory_space<any>>
    %c0_i32_2 = arith.constant 0 : i32
    %c0_i32_3 = arith.constant 0 : i32
    %1 = tpu.memref_slice %arg1[%c0_i32_2, %c0_i32_3] : memref<8x256xf32, #tpu.memory_space<any>> -> memref<8x256xf32, #tpu.memory_space<any>>
    %2 = tpu.memref_slice %arg2[%c0_i32] : memref<1x!tpu.dma_semaphore, #tpu.memory_space<semaphore_mem>> -> memref<1x!tpu.dma_semaphore, #tpu.memory_space<semaphore_mem>>
    %3 = tpu.memref_squeeze %2 : memref<1x!tpu.dma_semaphore, #tpu.memory_space<semaphore_mem>> -> memref<!tpu.dma_semaphore, #tpu.memory_space<semaphore_mem>>
    tpu.enqueue_dma source(%0 : memref<8x256xf32, #tpu.memory_space<any>>) target(%1 : memref<8x256xf32, #tpu.memory_space<any>>) target_semaphore(%3 : memref<!tpu.dma_semaphore, #tpu.memory_space<semaphore_mem>>)
    %c0_i32_4 = arith.constant 0 : i32
    %c0_i32_5 = arith.constant 0 : i32
    %c0_i32_6 = arith.constant 0 : i32
    %4 = tpu.memref_slice %arg0[%c0_i32_5, %c0_i32_6] : memref<8x256xf32, #tpu.memory_space<any>> -> memref<8x256xf32, #tpu.memory_space<any>>
    %c0_i32_7 = arith.constant 0 : i32
    %c0_i32_8 = arith.constant 0 : i32
    %5 = tpu.memref_slice %arg1[%c0_i32_7, %c0_i32_8] : memref<8x256xf32, #tpu.memory_space<any>> -> memref<8x256xf32, #tpu.memory_space<any>>
    %6 = tpu.memref_slice %arg2[%c0_i32_4] : memref<1x!tpu.dma_semaphore, #tpu.memory_space<semaphore_mem>> -> memref<1x!tpu.dma_semaphore, #tpu.memory_space<semaphore_mem>>
    %7 = tpu.memref_squeeze %6 : memref<1x!tpu.dma_semaphore, #tpu.memory_space<semaphore_mem>> -> memref<!tpu.dma_semaphore, #tpu.memory_space<semaphore_mem>>
    tpu.wait_dma2 semaphore(%7 : memref<!tpu.dma_semaphore, #tpu.memory_space<semaphore_mem>>) src(%4 : memref<8x256xf32, #tpu.memory_space<any>>) dst(%5 : memref<8x256xf32, #tpu.memory_space<any>>)
    return
  }
}

</mosaic_0001>

<llo_original>
// kernel: tpu_custom_call.1
$region0: #{tpu_custom_call.1}
  #allocation0 [shape = 'u32[]', space=smem, size = 0x4, offset = 0x4, fixed_abs, tag = 'smem constant byte address 0x4 - core index']
  #allocation1 [shape = 'u32[72,128]{1,0:T(1,128)}', space=vmem, size = 0x9000, scoped, tag = 'internal scratch']
  #allocation2 [shape = 's32[1]{0}', space=sflag, size = 0x4, scoped, tag = 'scratch operand']
  #allocation3 [shape = 's32[]', space=sflag, size = 0x4, offset = 0, fixed_abs, tag = 'sflag constant byte address 0x0 - dummy sync flag']
  #allocation4 [shape = 'u32[0]{0}', space=smem, size = 0, offset = 0, fixed_abs, tag = 'smem constant byte address 0x0 - null']
  %s0 = inlined_call_operand.hbm [shape: f32[8,256], index: 0, kind: input, shape index: {}]
  %s1 = inlined_call_operand.hbm [shape: f32[8,256], index: 1, kind: output, shape index: {}]
  %s2 = sld [smem:[#allocation0]]
  $region2: #{tpu_custom_call.1} parent=0
    _
  %s4 = ssub.s32 1, %s2
  %s5 = scalar_select 0, %s4, %s2
  %s7 = sshll.u32 1, 14
  %s8 = sxor.u32 4294967295, %s7
  %s10 = sshll.u32 %s0, 4
  %s11 = int_to_ptr.hbm [resolvable:$true] %s10
  %s12 = sshll.u32 %s1, 4
  %s13 = int_to_ptr.hbm [resolvable:$true] %s12
  %16 = dma.general %s11, 256, %s13, [#allocation2], [#allocation3], [#allocation4], 0, 0
  %s17 = smul.u32 8, 1
  %s18 = smul.u32 %s17, 2
  %s19 = sshll.u32 %s18, 4
  %20 = dma.done [#allocation2], %s19
  %21 = vsyncmov [#allocation2]
  %s22 = vpop.sfrf %21
  %p23 = scmp.eq.s32.totalorder %s22, 0
  %p24 = pneg %p23
  %26 = shalt.err (%p24)

</llo_original>
